<compile_context>
chip_gen: v7x
topology: tpu7x:2x2x1
jax: 0.10.0
libtpu: 0.0.40
codegen_flags: <defaults>
</compile_context>

<pallas_src>
import functools

import jax
import jax.numpy as jnp
from jax.experimental import pallas as pl
from jax.experimental.pallas import tpu as pltpu


def _pick_row_tile(h_out: int, w_out: int) -> int:
    """Smallest divisor th of h_out whose flattened tile width th*w_out is a
    multiple of 128 lanes (lane-dense output stores).  Falls back to a single
    tile (th == h_out), which is always layout-legal since the block then spans
    the full flattened spatial axis."""
    for th in range(1, h_out):
        if h_out % th == 0 and (th * w_out) % 128 == 0:
            return th
    return h_out


def _sepconv_kernel(x_ref, wdw_ref, wpw_ref, bias_ref, o_ref, *,
                    stride: int, ksize: int, th: int, c_in: int, w_out: int):
    # x_ref:    (1, C_in, H_pad, W_pad)  padded image of one batch element (VMEM)
    # wdw_ref:  (C_in*K*K,)              depthwise weights (SMEM, scalar reads)
    # wpw_ref:  (C_out, C_in)            pointwise weights (VMEM)
    # bias_ref: (C_out, 1)               folded bias: Wpw @ b_dw + b_pw (VMEM)
    # o_ref:    (1, C_out, th*W_out)     lane-dense output row tile
    c_out = o_ref.shape[1]
    pb = th * w_out
    rows_needed = (th - 1) * stride + ksize

    row_step = th * stride
    row0 = pl.program_id(1) * row_step
    if row_step % 8 == 0:
        row0 = pl.multiple_of(row0, 8)          # sublane-aligned dynamic row start

    wpw = wpw_ref[...]                          # (C_out, C_in) — hoisted out of loops
    bias = bias_ref[...]                        # (C_out, 1)

    def depthwise_channel(c):
        # K*K shifted/strided taps of one channel, f32 accumulation on the VPU.
        xc = x_ref[0, c, pl.ds(row0, rows_needed), :].astype(jnp.float32)
        acc = jnp.zeros((th, w_out), jnp.float32)
        for ki in range(ksize):
            for kj in range(ksize):
                w = wdw_ref[c * ksize * ksize + ki * ksize + kj]   # SMEM scalar
                patch = jax.lax.slice(
                    xc, (ki, kj),
                    (ki + (th - 1) * stride + 1, kj + (w_out - 1) * stride + 1),
                    (stride, stride))
                acc = acc + patch * w
        # (th, W_out) -> (1, th*W_out): one row-major lane-concat relayout per
        # input channel, done only after all K*K taps have accumulated.
        return jnp.concatenate([acc[r:r + 1, :] for r in range(th)], axis=1)

    # ---- pointwise 1x1 conv on the lane-dense tile ----
    if c_in <= 16:
        # Tiny channel count: skip the MXU; fuse depthwise output straight into
        # C_in broadcast-FMA outer products on the VPU.
        acc_pw = jnp.zeros((c_out, pb), jnp.float32)
        for c in range(c_in):
            acc_pw = acc_pw + wpw[:, c:c + 1] * depthwise_channel(c)
        out = acc_pw + bias
    else:
        # Larger channel counts: MXU matmul on the lane-dense tile.
        dw = jnp.concatenate([depthwise_channel(c) for c in range(c_in)], axis=0)
        out = jnp.dot(wpw, dw, preferred_element_type=jnp.float32) + bias

    o_ref[0] = out.astype(o_ref.dtype)          # dense 128+-lane store


def separable_conv2d(x_nchw, w_dw, b_dw, w_pw, b_pw, *, stride=1, padding=0):
    """x_nchw: (N, C_in, H, W); w_dw: (C_in, 1, K, K); w_pw: (C_out, C_in, 1, 1)."""
    N, C_in, H, W = x_nchw.shape
    K = w_dw.shape[-1]
    C_out = w_pw.shape[0]

    # Spatial zero-padding only; layout stays NCHW (no wrapper transposes).
    x_pad = jnp.pad(x_nchw, ((0, 0), (0, 0), (padding, padding), (padding, padding)))
    H_pad, W_pad = H + 2 * padding, W + 2 * padding
    H_out = (H_pad - K) // stride + 1
    W_out = (W_pad - K) // stride + 1
    P = H_out * W_out

    th = _pick_row_tile(H_out, W_out)
    num_h = H_out // th
    PB = th * W_out

    f32 = jnp.float32
    wdw_s = w_dw[:, 0, :, :].reshape(C_in * K * K).astype(f32)   # flat SMEM table
    wpw = w_pw[:, :, 0, 0].astype(f32)                           # (C_out, C_in)
    # Fold the depthwise bias through the pointwise conv: one bias add in-kernel.
    bias_eff = (wpw @ b_dw.astype(f32) + b_pw.astype(f32)).reshape(C_out, 1)

    kernel = functools.partial(_sepconv_kernel, stride=stride, ksize=K,
                               th=th, c_in=C_in, w_out=W_out)

    out_flat = pl.pallas_call(
        kernel,
        out_shape=jax.ShapeDtypeStruct((N, C_out, P), x_nchw.dtype),
        grid=(N, num_h),
        in_specs=[
            # Full padded image per batch element.  Its block index is h-invariant,
            # so it is only DMA'd when n changes; the kernel dynamically slices the
            # th*stride + K - 1 rows it needs.
            # TODO(synk): for very large images, switch to element-offset halo row
            # blocks to bound VMEM further (esp. on v7x with 64 MiB VMEM).
            pl.BlockSpec((1, C_in, H_pad, W_pad), lambda n, h: (n, 0, 0, 0)),
            pl.BlockSpec(memory_space=pltpu.MemorySpace.SMEM),
            pl.BlockSpec((C_out, C_in), lambda n, h: (0, 0)),
            pl.BlockSpec((C_out, 1), lambda n, h: (0, 0)),
        ],
        out_specs=pl.BlockSpec((1, C_out, PB), lambda n, h: (n, 0, h)),
        compiler_params=pltpu.CompilerParams(
            dimension_semantics=("parallel", "parallel"),
            vmem_limit_bytes=32 * 1024 * 1024),
    )(x_pad, wdw_s, wpw, bias_eff)

    # (N, C_out, H_out*W_out) -> (N, C_out, H_out, W_out): pure reshape, no transpose.
    return out_flat.reshape(N, C_out, H_out, W_out)


def _init_params(key, in_channels, out_channels, kernel_size):
    """Kaiming-normal (nonlinearity='relu') weights, constant 0.2 biases."""
    k_dw, k_pw = jax.random.split(key)
    # depthwise: weight (C_in, 1, K, K), fan_in = 1 * K * K
    std_dw = (2.0 / (kernel_size * kernel_size)) ** 0.5
    w_dw = std_dw * jax.random.normal(
        k_dw, (in_channels, 1, kernel_size, kernel_size), jnp.float32)
    b_dw = jnp.full((in_channels,), 0.2, jnp.float32)
    # pointwise: weight (C_out, C_in, 1, 1), fan_in = C_in
    std_pw = (2.0 / in_channels) ** 0.5
    w_pw = std_pw * jax.random.normal(
        k_pw, (out_channels, in_channels, 1, 1), jnp.float32)
    b_pw = jnp.full((out_channels,), 0.2, jnp.float32)
    return w_dw, b_dw, w_pw, b_pw


def _reference(x, w_dw, b_dw, w_pw, b_pw, stride, padding):
    """Pure-JAX reference (lax conv) matching torch Conv2d semantics."""
    dn = ('NCHW', 'OIHW', 'NCHW')
    C_in = x.shape[1]
    y = jax.lax.conv_general_dilated(
        x, w_dw, window_strides=(stride, stride),
        padding=((padding, padding), (padding, padding)),
        dimension_numbers=dn, feature_group_count=C_in)
    y = y + b_dw[None, :, None, None]
    z = jax.lax.conv_general_dilated(
        y, w_pw, window_strides=(1, 1), padding='VALID',
        dimension_numbers=dn)
    return z + b_pw[None, :, None, None]


if __name__ == "__main__":
    key = jax.random.PRNGKey(0)
    k_x, k_p = jax.random.split(key)

    N, C_in, H, W = 2, 4, 16, 16
    C_out, K, stride, padding = 8, 3, 1, 1

    x = jax.random.normal(k_x, (N, C_in, H, W), jnp.float32)
    w_dw, b_dw, w_pw, b_pw = _init_params(k_p, C_in, C_out, K)

    out = separable_conv2d(x, w_dw, b_dw, w_pw, b_pw, stride=stride, padding=padding)
    out = jax.block_until_ready(out)

    ref = _reference(x, w_dw, b_dw, w_pw, b_pw, stride, padding)
    assert out.shape == ref.shape, (out.shape, ref.shape)
    assert jnp.allclose(out, ref, atol=1e-4, rtol=1e-4), "mismatch vs reference conv"

    print("KERNEL_OK")
</pallas_src>

<mosaic_0001>
module attributes {stable_mosaic.version = 11 : i64} {
  func.func @_sepconv_kernel(%arg0: i32, %arg1: i32, %arg2: memref<1x4x18x18xf32, #tpu.memory_space<vmem>>, %arg3: memref<36xf32, #tpu.memory_space<smem>>, %arg4: memref<8x4xf32, #tpu.memory_space<vmem>>, %arg5: memref<8x1xf32, #tpu.memory_space<vmem>>, %arg6: memref<1x8x128xf32, #tpu.memory_space<vmem>>) attributes {dimension_semantics = [#tpu.dimension_semantics<parallel>, #tpu.dimension_semantics<parallel>], iteration_bounds = array<i64: 2, 2>, scalar_prefetch = 0 : i64, scratch_operands = 0 : i64, tpu.core_type = #tpu.core_type<tc>, window_params = [{transform_indices = @transform_0, window_bounds = array<i64: 1, 4, 18, 18>}, {transform_indices = @transform_1, window_bounds = array<i64: 36>}, {pipeline_mode = #tpu.pipeline_mode<synchronous>, transform_indices = @transform_2, window_bounds = array<i64: 8, 4>}, {pipeline_mode = #tpu.pipeline_mode<synchronous>, transform_indices = @transform_3, window_bounds = array<i64: 8, 1>}, {transform_indices = @transform_4, window_bounds = array<i64: 1, 8, 128>}]} {
    %c8_i32 = arith.constant 8 : i32
    %0 = arith.muli %arg1, %c8_i32 : i32
    %1 = tpu.assume_multiple %0, 8 : i32
    %c0 = arith.constant 0 : index
    %c0_0 = arith.constant 0 : index
    %2 = vector.load %arg4[%c0, %c0_0] : memref<8x4xf32, #tpu.memory_space<vmem>>, vector<8x4xf32>
    %c0_1 = arith.constant 0 : index
    %c0_2 = arith.constant 0 : index
    %3 = vector.load %arg5[%c0_1, %c0_2] : memref<8x1xf32, #tpu.memory_space<vmem>>, vector<8x1xf32>
    %cst = arith.constant 0.000000e+00 : f32
    %4 = vector.broadcast %cst : f32 to vector<8x128xf32>
    %5 = vector.extract_strided_slice %2 {offsets = [0, 0], sizes = [8, 1], strides = [1, 1]} : vector<8x4xf32> to vector<8x1xf32>
    %c0_3 = arith.constant 0 : index
    %c0_4 = arith.constant 0 : index
    %6 = arith.index_cast %1 : i32 to index
    %c0_5 = arith.constant 0 : index
    %7 = vector.load %arg2[%c0_3, %c0_4, %6, %c0_5] : memref<1x4x18x18xf32, #tpu.memory_space<vmem>>, vector<1x1x10x18xf32>
    %8 = vector.shape_cast %7 : vector<1x1x10x18xf32> to vector<10x18xf32>
    %cst_6 = arith.constant 0.000000e+00 : f32
    %9 = vector.broadcast %cst_6 : f32 to vector<8x16xf32>
    %c0_7 = arith.constant 0 : index
    %10 = memref.load %arg3[%c0_7] : memref<36xf32, #tpu.memory_space<smem>>
    %11 = vector.extract_strided_slice %8 {offsets = [0, 0], sizes = [8, 16], strides = [1, 1]} : vector<10x18xf32> to vector<8x16xf32>
    %12 = vector.broadcast %10 : f32 to vector<8x16xf32>
    %13 = arith.mulf %11, %12 : vector<8x16xf32>
    %14 = arith.addf %9, %13 : vector<8x16xf32>
    %c1 = arith.constant 1 : index
    %15 = memref.load %arg3[%c1] : memref<36xf32, #tpu.memory_space<smem>>
    %16 = vector.extract_strided_slice %8 {offsets = [0, 1], sizes = [8, 16], strides = [1, 1]} : vector<10x18xf32> to vector<8x16xf32>
    %17 = vector.broadcast %15 : f32 to vector<8x16xf32>
    %18 = arith.mulf %16, %17 : vector<8x16xf32>
    %19 = arith.addf %14, %18 : vector<8x16xf32>
    %c2 = arith.constant 2 : index
    %20 = memref.load %arg3[%c2] : memref<36xf32, #tpu.memory_space<smem>>
    %21 = vector.extract_strided_slice %8 {offsets = [0, 2], sizes = [8, 16], strides = [1, 1]} : vector<10x18xf32> to vector<8x16xf32>
    %22 = vector.broadcast %20 : f32 to vector<8x16xf32>
    %23 = arith.mulf %21, %22 : vector<8x16xf32>
    %24 = arith.addf %19, %23 : vector<8x16xf32>
    %c3 = arith.constant 3 : index
    %25 = memref.load %arg3[%c3] : memref<36xf32, #tpu.memory_space<smem>>
    %26 = vector.extract_strided_slice %8 {offsets = [1, 0], sizes = [8, 16], strides = [1, 1]} : vector<10x18xf32> to vector<8x16xf32>
    %27 = vector.broadcast %25 : f32 to vector<8x16xf32>
    %28 = arith.mulf %26, %27 : vector<8x16xf32>
    %29 = arith.addf %24, %28 : vector<8x16xf32>
    %c4 = arith.constant 4 : index
    %30 = memref.load %arg3[%c4] : memref<36xf32, #tpu.memory_space<smem>>
    %31 = vector.extract_strided_slice %8 {offsets = [1, 1], sizes = [8, 16], strides = [1, 1]} : vector<10x18xf32> to vector<8x16xf32>
    %32 = vector.broadcast %30 : f32 to vector<8x16xf32>
    %33 = arith.mulf %31, %32 : vector<8x16xf32>
    %34 = arith.addf %29, %33 : vector<8x16xf32>
    %c5 = arith.constant 5 : index
    %35 = memref.load %arg3[%c5] : memref<36xf32, #tpu.memory_space<smem>>
    %36 = vector.extract_strided_slice %8 {offsets = [1, 2], sizes = [8, 16], strides = [1, 1]} : vector<10x18xf32> to vector<8x16xf32>
    %37 = vector.broadcast %35 : f32 to vector<8x16xf32>
    %38 = arith.mulf %36, %37 : vector<8x16xf32>
    %39 = arith.addf %34, %38 : vector<8x16xf32>
    %c6 = arith.constant 6 : index
    %40 = memref.load %arg3[%c6] : memref<36xf32, #tpu.memory_space<smem>>
    %41 = vector.extract_strided_slice %8 {offsets = [2, 0], sizes = [8, 16], strides = [1, 1]} : vector<10x18xf32> to vector<8x16xf32>
    %42 = vector.broadcast %40 : f32 to vector<8x16xf32>
    %43 = arith.mulf %41, %42 : vector<8x16xf32>
    %44 = arith.addf %39, %43 : vector<8x16xf32>
    %c7 = arith.constant 7 : index
    %45 = memref.load %arg3[%c7] : memref<36xf32, #tpu.memory_space<smem>>
    %46 = vector.extract_strided_slice %8 {offsets = [2, 1], sizes = [8, 16], strides = [1, 1]} : vector<10x18xf32> to vector<8x16xf32>
    %47 = vector.broadcast %45 : f32 to vector<8x16xf32>
    %48 = arith.mulf %46, %47 : vector<8x16xf32>
    %49 = arith.addf %44, %48 : vector<8x16xf32>
    %c8 = arith.constant 8 : index
    %50 = memref.load %arg3[%c8] : memref<36xf32, #tpu.memory_space<smem>>
    %51 = vector.extract_strided_slice %8 {offsets = [2, 2], sizes = [8, 16], strides = [1, 1]} : vector<10x18xf32> to vector<8x16xf32>
    %52 = vector.broadcast %50 : f32 to vector<8x16xf32>
    %53 = arith.mulf %51, %52 : vector<8x16xf32>
    %54 = arith.addf %49, %53 : vector<8x16xf32>
    %55 = vector.extract_strided_slice %54 {offsets = [0, 0], sizes = [1, 16], strides = [1, 1]} : vector<8x16xf32> to vector<1x16xf32>
    %56 = vector.extract_strided_slice %54 {offsets = [1, 0], sizes = [1, 16], strides = [1, 1]} : vector<8x16xf32> to vector<1x16xf32>
    %57 = vector.extract_strided_slice %54 {offsets = [2, 0], sizes = [1, 16], strides = [1, 1]} : vector<8x16xf32> to vector<1x16xf32>
    %58 = vector.extract_strided_slice %54 {offsets = [3, 0], sizes = [1, 16], strides = [1, 1]} : vector<8x16xf32> to vector<1x16xf32>
    %59 = vector.extract_strided_slice %54 {offsets = [4, 0], sizes = [1, 16], strides = [1, 1]} : vector<8x16xf32> to vector<1x16xf32>
    %60 = vector.extract_strided_slice %54 {offsets = [5, 0], sizes = [1, 16], strides = [1, 1]} : vector<8x16xf32> to vector<1x16xf32>
    %61 = vector.extract_strided_slice %54 {offsets = [6, 0], sizes = [1, 16], strides = [1, 1]} : vector<8x16xf32> to vector<1x16xf32>
    %62 = vector.extract_strided_slice %54 {offsets = [7, 0], sizes = [1, 16], strides = [1, 1]} : vector<8x16xf32> to vector<1x16xf32>
    %63 = tpu.concatenate %55, %56, %57, %58, %59, %60, %61, %62 in 1 : vector<1x16xf32>, vector<1x16xf32>, vector<1x16xf32>, vector<1x16xf32>, vector<1x16xf32>, vector<1x16xf32>, vector<1x16xf32>, vector<1x16xf32> -> vector<1x128xf32>
    %64 = vector.broadcast %5 : vector<8x1xf32> to vector<8x128xf32>
    %65 = vector.broadcast %63 : vector<1x128xf32> to vector<8x128xf32>
    %66 = arith.mulf %64, %65 : vector<8x128xf32>
    %67 = arith.addf %4, %66 : vector<8x128xf32>
    %68 = vector.extract_strided_slice %2 {offsets = [0, 1], sizes = [8, 1], strides = [1, 1]} : vector<8x4xf32> to vector<8x1xf32>
    %c0_8 = arith.constant 0 : index
    %c1_9 = arith.constant 1 : index
    %69 = arith.index_cast %1 : i32 to index
    %c0_10 = arith.constant 0 : index
    %70 = vector.load %arg2[%c0_8, %c1_9, %69, %c0_10] : memref<1x4x18x18xf32, #tpu.memory_space<vmem>>, vector<1x1x10x18xf32>
    %71 = vector.shape_cast %70 : vector<1x1x10x18xf32> to vector<10x18xf32>
    %cst_11 = arith.constant 0.000000e+00 : f32
    %72 = vector.broadcast %cst_11 : f32 to vector<8x16xf32>
    %c9 = arith.constant 9 : index
    %73 = memref.load %arg3[%c9] : memref<36xf32, #tpu.memory_space<smem>>
    %74 = vector.extract_strided_slice %71 {offsets = [0, 0], sizes = [8, 16], strides = [1, 1]} : vector<10x18xf32> to vector<8x16xf32>
    %75 = vector.broadcast %73 : f32 to vector<8x16xf32>
    %76 = arith.mulf %74, %75 : vector<8x16xf32>
    %77 = arith.addf %72, %76 : vector<8x16xf32>
    %c10 = arith.constant 10 : index
    %78 = memref.load %arg3[%c10] : memref<36xf32, #tpu.memory_space<smem>>
    %79 = vector.extract_strided_slice %71 {offsets = [0, 1], sizes = [8, 16], strides = [1, 1]} : vector<10x18xf32> to vector<8x16xf32>
    %80 = vector.broadcast %78 : f32 to vector<8x16xf32>
    %81 = arith.mulf %79, %80 : vector<8x16xf32>
    %82 = arith.addf %77, %81 : vector<8x16xf32>
    %c11 = arith.constant 11 : index
    %83 = memref.load %arg3[%c11] : memref<36xf32, #tpu.memory_space<smem>>
    %84 = vector.extract_strided_slice %71 {offsets = [0, 2], sizes = [8, 16], strides = [1, 1]} : vector<10x18xf32> to vector<8x16xf32>
    %85 = vector.broadcast %83 : f32 to vector<8x16xf32>
    %86 = arith.mulf %84, %85 : vector<8x16xf32>
    %87 = arith.addf %82, %86 : vector<8x16xf32>
    %c12 = arith.constant 12 : index
    %88 = memref.load %arg3[%c12] : memref<36xf32, #tpu.memory_space<smem>>
    %89 = vector.extract_strided_slice %71 {offsets = [1, 0], sizes = [8, 16], strides = [1, 1]} : vector<10x18xf32> to vector<8x16xf32>
    %90 = vector.broadcast %88 : f32 to vector<8x16xf32>
    %91 = arith.mulf %89, %90 : vector<8x16xf32>
    %92 = arith.addf %87, %91 : vector<8x16xf32>
    %c13 = arith.constant 13 : index
    %93 = memref.load %arg3[%c13] : memref<36xf32, #tpu.memory_space<smem>>
    %94 = vector.extract_strided_slice %71 {offsets = [1, 1], sizes = [8, 16], strides = [1, 1]} : vector<10x18xf32> to vector<8x16xf32>
    %95 = vector.broadcast %93 : f32 to vector<8x16xf32>
    %96 = arith.mulf %94, %95 : vector<8x16xf32>
    %97 = arith.addf %92, %96 : vector<8x16xf32>
    %c14 = arith.constant 14 : index
    %98 = memref.load %arg3[%c14] : memref<36xf32, #tpu.memory_space<smem>>
    %99 = vector.extract_strided_slice %71 {offsets = [1, 2], sizes = [8, 16], strides = [1, 1]} : vector<10x18xf32> to vector<8x16xf32>
    %100 = vector.broadcast %98 : f32 to vector<8x16xf32>
    %101 = arith.mulf %99, %100 : vector<8x16xf32>
    %102 = arith.addf %97, %101 : vector<8x16xf32>
    %c15 = arith.constant 15 : index
    %103 = memref.load %arg3[%c15] : memref<36xf32, #tpu.memory_space<smem>>
    %104 = vector.extract_strided_slice %71 {offsets = [2, 0], sizes = [8, 16], strides = [1, 1]} : vector<10x18xf32> to vector<8x16xf32>
    %105 = vector.broadcast %103 : f32 to vector<8x16xf32>
    %106 = arith.mulf %104, %105 : vector<8x16xf32>
    %107 = arith.addf %102, %106 : vector<8x16xf32>
    %c16 = arith.constant 16 : index
    %108 = memref.load %arg3[%c16] : memref<36xf32, #tpu.memory_space<smem>>
    %109 = vector.extract_strided_slice %71 {offsets = [2, 1], sizes = [8, 16], strides = [1, 1]} : vector<10x18xf32> to vector<8x16xf32>
    %110 = vector.broadcast %108 : f32 to vector<8x16xf32>
    %111 = arith.mulf %109, %110 : vector<8x16xf32>
    %112 = arith.addf %107, %111 : vector<8x16xf32>
    %c17 = arith.constant 17 : index
    %113 = memref.load %arg3[%c17] : memref<36xf32, #tpu.memory_space<smem>>
    %114 = vector.extract_strided_slice %71 {offsets = [2, 2], sizes = [8, 16], strides = [1, 1]} : vector<10x18xf32> to vector<8x16xf32>
    %115 = vector.broadcast %113 : f32 to vector<8x16xf32>
    %116 = arith.mulf %114, %115 : vector<8x16xf32>
    %117 = arith.addf %112, %116 : vector<8x16xf32>
    %118 = vector.extract_strided_slice %117 {offsets = [0, 0], sizes = [1, 16], strides = [1, 1]} : vector<8x16xf32> to vector<1x16xf32>
    %119 = vector.extract_strided_slice %117 {offsets = [1, 0], sizes = [1, 16], strides = [1, 1]} : vector<8x16xf32> to vector<1x16xf32>
    %120 = vector.extract_strided_slice %117 {offsets = [2, 0], sizes = [1, 16], strides = [1, 1]} : vector<8x16xf32> to vector<1x16xf32>
    %121 = vector.extract_strided_slice %117 {offsets = [3, 0], sizes = [1, 16], strides = [1, 1]} : vector<8x16xf32> to vector<1x16xf32>
    %122 = vector.extract_strided_slice %117 {offsets = [4, 0], sizes = [1, 16], strides = [1, 1]} : vector<8x16xf32> to vector<1x16xf32>
    %123 = vector.extract_strided_slice %117 {offsets = [5, 0], sizes = [1, 16], strides = [1, 1]} : vector<8x16xf32> to vector<1x16xf32>
    %124 = vector.extract_strided_slice %117 {offsets = [6, 0], sizes = [1, 16], strides = [1, 1]} : vector<8x16xf32> to vector<1x16xf32>
    %125 = vector.extract_strided_slice %117 {offsets = [7, 0], sizes = [1, 16], strides = [1, 1]} : vector<8x16xf32> to vector<1x16xf32>
    %126 = tpu.concatenate %118, %119, %120, %121, %122, %123, %124, %125 in 1 : vector<1x16xf32>, vector<1x16xf32>, vector<1x16xf32>, vector<1x16xf32>, vector<1x16xf32>, vector<1x16xf32>, vector<1x16xf32>, vector<1x16xf32> -> vector<1x128xf32>
    %127 = vector.broadcast %68 : vector<8x1xf32> to vector<8x128xf32>
    %128 = vector.broadcast %126 : vector<1x128xf32> to vector<8x128xf32>
    %129 = arith.mulf %127, %128 : vector<8x128xf32>
    %130 = arith.addf %67, %129 : vector<8x128xf32>
    %131 = vector.extract_strided_slice %2 {offsets = [0, 2], sizes = [8, 1], strides = [1, 1]} : vector<8x4xf32> to vector<8x1xf32>
    %c0_12 = arith.constant 0 : index
    %c2_13 = arith.constant 2 : index
    %132 = arith.index_cast %1 : i32 to index
    %c0_14 = arith.constant 0 : index
    %133 = vector.load %arg2[%c0_12, %c2_13, %132, %c0_14] : memref<1x4x18x18xf32, #tpu.memory_space<vmem>>, vector<1x1x10x18xf32>
    %134 = vector.shape_cast %133 : vector<1x1x10x18xf32> to vector<10x18xf32>
    %cst_15 = arith.constant 0.000000e+00 : f32
    %135 = vector.broadcast %cst_15 : f32 to vector<8x16xf32>
    %c18 = arith.constant 18 : index
    %136 = memref.load %arg3[%c18] : memref<36xf32, #tpu.memory_space<smem>>
    %137 = vector.extract_strided_slice %134 {offsets = [0, 0], sizes = [8, 16], strides = [1, 1]} : vector<10x18xf32> to vector<8x16xf32>
    %138 = vector.broadcast %136 : f32 to vector<8x16xf32>
    %139 = arith.mulf %137, %138 : vector<8x16xf32>
    %140 = arith.addf %135, %139 : vector<8x16xf32>
    %c19 = arith.constant 19 : index
    %141 = memref.load %arg3[%c19] : memref<36xf32, #tpu.memory_space<smem>>
    %142 = vector.extract_strided_slice %134 {offsets = [0, 1], sizes = [8, 16], strides = [1, 1]} : vector<10x18xf32> to vector<8x16xf32>
    %143 = vector.broadcast %141 : f32 to vector<8x16xf32>
    %144 = arith.mulf %142, %143 : vector<8x16xf32>
    %145 = arith.addf %140, %144 : vector<8x16xf32>
    %c20 = arith.constant 20 : index
    %146 = memref.load %arg3[%c20] : memref<36xf32, #tpu.memory_space<smem>>
    %147 = vector.extract_strided_slice %134 {offsets = [0, 2], sizes = [8, 16], strides = [1, 1]} : vector<10x18xf32> to vector<8x16xf32>
    %148 = vector.broadcast %146 : f32 to vector<8x16xf32>
    %149 = arith.mulf %147, %148 : vector<8x16xf32>
    %150 = arith.addf %145, %149 : vector<8x16xf32>
    %c21 = arith.constant 21 : index
    %151 = memref.load %arg3[%c21] : memref<36xf32, #tpu.memory_space<smem>>
    %152 = vector.extract_strided_slice %134 {offsets = [1, 0], sizes = [8, 16], strides = [1, 1]} : vector<10x18xf32> to vector<8x16xf32>
    %153 = vector.broadcast %151 : f32 to vector<8x16xf32>
    %154 = arith.mulf %152, %153 : vector<8x16xf32>
    %155 = arith.addf %150, %154 : vector<8x16xf32>
    %c22 = arith.constant 22 : index
    %156 = memref.load %arg3[%c22] : memref<36xf32, #tpu.memory_space<smem>>
    %157 = vector.extract_strided_slice %134 {offsets = [1, 1], sizes = [8, 16], strides = [1, 1]} : vector<10x18xf32> to vector<8x16xf32>
    %158 = vector.broadcast %156 : f32 to vector<8x16xf32>
    %159 = arith.mulf %157, %158 : vector<8x16xf32>
    %160 = arith.addf %155, %159 : vector<8x16xf32>
    %c23 = arith.constant 23 : index
    %161 = memref.load %arg3[%c23] : memref<36xf32, #tpu.memory_space<smem>>
    %162 = vector.extract_strided_slice %134 {offsets = [1, 2], sizes = [8, 16], strides = [1, 1]} : vector<10x18xf32> to vector<8x16xf32>
    %163 = vector.broadcast %161 : f32 to vector<8x16xf32>
    %164 = arith.mulf %162, %163 : vector<8x16xf32>
    %165 = arith.addf %160, %164 : vector<8x16xf32>
    %c24 = arith.constant 24 : index
    %166 = memref.load %arg3[%c24] : memref<36xf32, #tpu.memory_space<smem>>
    %167 = vector.extract_strided_slice %134 {offsets = [2, 0], sizes = [8, 16], strides = [1, 1]} : vector<10x18xf32> to vector<8x16xf32>
    %168 = vector.broadcast %166 : f32 to vector<8x16xf32>
    %169 = arith.mulf %167, %168 : vector<8x16xf32>
    %170 = arith.addf %165, %169 : vector<8x16xf32>
    %c25 = arith.constant 25 : index
    %171 = memref.load %arg3[%c25] : memref<36xf32, #tpu.memory_space<smem>>
    %172 = vector.extract_strided_slice %134 {offsets = [2, 1], sizes = [8, 16], strides = [1, 1]} : vector<10x18xf32> to vector<8x16xf32>
    %173 = vector.broadcast %171 : f32 to vector<8x16xf32>
    %174 = arith.mulf %172, %173 : vector<8x16xf32>
    %175 = arith.addf %170, %174 : vector<8x16xf32>
    %c26 = arith.constant 26 : index
    %176 = memref.load %arg3[%c26] : memref<36xf32, #tpu.memory_space<smem>>
    %177 = vector.extract_strided_slice %134 {offsets = [2, 2], sizes = [8, 16], strides = [1, 1]} : vector<10x18xf32> to vector<8x16xf32>
    %178 = vector.broadcast %176 : f32 to vector<8x16xf32>
    %179 = arith.mulf %177, %178 : vector<8x16xf32>
    %180 = arith.addf %175, %179 : vector<8x16xf32>
    %181 = vector.extract_strided_slice %180 {offsets = [0, 0], sizes = [1, 16], strides = [1, 1]} : vector<8x16xf32> to vector<1x16xf32>
    %182 = vector.extract_strided_slice %180 {offsets = [1, 0], sizes = [1, 16], strides = [1, 1]} : vector<8x16xf32> to vector<1x16xf32>
    %183 = vector.extract_strided_slice %180 {offsets = [2, 0], sizes = [1, 16], strides = [1, 1]} : vector<8x16xf32> to vector<1x16xf32>
    %184 = vector.extract_strided_slice %180 {offsets = [3, 0], sizes = [1, 16], strides = [1, 1]} : vector<8x16xf32> to vector<1x16xf32>
    %185 = vector.extract_strided_slice %180 {offsets = [4, 0], sizes = [1, 16], strides = [1, 1]} : vector<8x16xf32> to vector<1x16xf32>
    %186 = vector.extract_strided_slice %180 {offsets = [5, 0], sizes = [1, 16], strides = [1, 1]} : vector<8x16xf32> to vector<1x16xf32>
    %187 = vector.extract_strided_slice %180 {offsets = [6, 0], sizes = [1, 16], strides = [1, 1]} : vector<8x16xf32> to vector<1x16xf32>
    %188 = vector.extract_strided_slice %180 {offsets = [7, 0], sizes = [1, 16], strides = [1, 1]} : vector<8x16xf32> to vector<1x16xf32>
    %189 = tpu.concatenate %181, %182, %183, %184, %185, %186, %187, %188 in 1 : vector<1x16xf32>, vector<1x16xf32>, vector<1x16xf32>, vector<1x16xf32>, vector<1x16xf32>, vector<1x16xf32>, vector<1x16xf32>, vector<1x16xf32> -> vector<1x128xf32>
    %190 = vector.broadcast %131 : vector<8x1xf32> to vector<8x128xf32>
    %191 = vector.broadcast %189 : vector<1x128xf32> to vector<8x128xf32>
    %192 = arith.mulf %190, %191 : vector<8x128xf32>
    %193 = arith.addf %130, %192 : vector<8x128xf32>
    %194 = vector.extract_strided_slice %2 {offsets = [0, 3], sizes = [8, 1], strides = [1, 1]} : vector<8x4xf32> to vector<8x1xf32>
    %c0_16 = arith.constant 0 : index
    %c3_17 = arith.constant 3 : index
    %195 = arith.index_cast %1 : i32 to index
    %c0_18 = arith.constant 0 : index
    %196 = vector.load %arg2[%c0_16, %c3_17, %195, %c0_18] : memref<1x4x18x18xf32, #tpu.memory_space<vmem>>, vector<1x1x10x18xf32>
    %197 = vector.shape_cast %196 : vector<1x1x10x18xf32> to vector<10x18xf32>
    %cst_19 = arith.constant 0.000000e+00 : f32
    %198 = vector.broadcast %cst_19 : f32 to vector<8x16xf32>
    %c27 = arith.constant 27 : index
    %199 = memref.load %arg3[%c27] : memref<36xf32, #tpu.memory_space<smem>>
    %200 = vector.extract_strided_slice %197 {offsets = [0, 0], sizes = [8, 16], strides = [1, 1]} : vector<10x18xf32> to vector<8x16xf32>
    %201 = vector.broadcast %199 : f32 to vector<8x16xf32>
    %202 = arith.mulf %200, %201 : vector<8x16xf32>
    %203 = arith.addf %198, %202 : vector<8x16xf32>
    %c28 = arith.constant 28 : index
    %204 = memref.load %arg3[%c28] : memref<36xf32, #tpu.memory_space<smem>>
    %205 = vector.extract_strided_slice %197 {offsets = [0, 1], sizes = [8, 16], strides = [1, 1]} : vector<10x18xf32> to vector<8x16xf32>
    %206 = vector.broadcast %204 : f32 to vector<8x16xf32>
    %207 = arith.mulf %205, %206 : vector<8x16xf32>
    %208 = arith.addf %203, %207 : vector<8x16xf32>
    %c29 = arith.constant 29 : index
    %209 = memref.load %arg3[%c29] : memref<36xf32, #tpu.memory_space<smem>>
    %210 = vector.extract_strided_slice %197 {offsets = [0, 2], sizes = [8, 16], strides = [1, 1]} : vector<10x18xf32> to vector<8x16xf32>
    %211 = vector.broadcast %209 : f32 to vector<8x16xf32>
    %212 = arith.mulf %210, %211 : vector<8x16xf32>
    %213 = arith.addf %208, %212 : vector<8x16xf32>
    %c30 = arith.constant 30 : index
    %214 = memref.load %arg3[%c30] : memref<36xf32, #tpu.memory_space<smem>>
    %215 = vector.extract_strided_slice %197 {offsets = [1, 0], sizes = [8, 16], strides = [1, 1]} : vector<10x18xf32> to vector<8x16xf32>
    %216 = vector.broadcast %214 : f32 to vector<8x16xf32>
    %217 = arith.mulf %215, %216 : vector<8x16xf32>
    %218 = arith.addf %213, %217 : vector<8x16xf32>
    %c31 = arith.constant 31 : index
    %219 = memref.load %arg3[%c31] : memref<36xf32, #tpu.memory_space<smem>>
    %220 = vector.extract_strided_slice %197 {offsets = [1, 1], sizes = [8, 16], strides = [1, 1]} : vector<10x18xf32> to vector<8x16xf32>
    %221 = vector.broadcast %219 : f32 to vector<8x16xf32>
    %222 = arith.mulf %220, %221 : vector<8x16xf32>
    %223 = arith.addf %218, %222 : vector<8x16xf32>
    %c32 = arith.constant 32 : index
    %224 = memref.load %arg3[%c32] : memref<36xf32, #tpu.memory_space<smem>>
    %225 = vector.extract_strided_slice %197 {offsets = [1, 2], sizes = [8, 16], strides = [1, 1]} : vector<10x18xf32> to vector<8x16xf32>
    %226 = vector.broadcast %224 : f32 to vector<8x16xf32>
    %227 = arith.mulf %225, %226 : vector<8x16xf32>
    %228 = arith.addf %223, %227 : vector<8x16xf32>
    %c33 = arith.constant 33 : index
    %229 = memref.load %arg3[%c33] : memref<36xf32, #tpu.memory_space<smem>>
    %230 = vector.extract_strided_slice %197 {offsets = [2, 0], sizes = [8, 16], strides = [1, 1]} : vector<10x18xf32> to vector<8x16xf32>
    %231 = vector.broadcast %229 : f32 to vector<8x16xf32>
    %232 = arith.mulf %230, %231 : vector<8x16xf32>
    %233 = arith.addf %228, %232 : vector<8x16xf32>
    %c34 = arith.constant 34 : index
    %234 = memref.load %arg3[%c34] : memref<36xf32, #tpu.memory_space<smem>>
    %235 = vector.extract_strided_slice %197 {offsets = [2, 1], sizes = [8, 16], strides = [1, 1]} : vector<10x18xf32> to vector<8x16xf32>
    %236 = vector.broadcast %234 : f32 to vector<8x16xf32>
    %237 = arith.mulf %235, %236 : vector<8x16xf32>
    %238 = arith.addf %233, %237 : vector<8x16xf32>
    %c35 = arith.constant 35 : index
    %239 = memref.load %arg3[%c35] : memref<36xf32, #tpu.memory_space<smem>>
    %240 = vector.extract_strided_slice %197 {offsets = [2, 2], sizes = [8, 16], strides = [1, 1]} : vector<10x18xf32> to vector<8x16xf32>
    %241 = vector.broadcast %239 : f32 to vector<8x16xf32>
    %242 = arith.mulf %240, %241 : vector<8x16xf32>
    %243 = arith.addf %238, %242 : vector<8x16xf32>
    %244 = vector.extract_strided_slice %243 {offsets = [0, 0], sizes = [1, 16], strides = [1, 1]} : vector<8x16xf32> to vector<1x16xf32>
    %245 = vector.extract_strided_slice %243 {offsets = [1, 0], sizes = [1, 16], strides = [1, 1]} : vector<8x16xf32> to vector<1x16xf32>
    %246 = vector.extract_strided_slice %243 {offsets = [2, 0], sizes = [1, 16], strides = [1, 1]} : vector<8x16xf32> to vector<1x16xf32>
    %247 = vector.extract_strided_slice %243 {offsets = [3, 0], sizes = [1, 16], strides = [1, 1]} : vector<8x16xf32> to vector<1x16xf32>
    %248 = vector.extract_strided_slice %243 {offsets = [4, 0], sizes = [1, 16], strides = [1, 1]} : vector<8x16xf32> to vector<1x16xf32>
    %249 = vector.extract_strided_slice %243 {offsets = [5, 0], sizes = [1, 16], strides = [1, 1]} : vector<8x16xf32> to vector<1x16xf32>
    %250 = vector.extract_strided_slice %243 {offsets = [6, 0], sizes = [1, 16], strides = [1, 1]} : vector<8x16xf32> to vector<1x16xf32>
    %251 = vector.extract_strided_slice %243 {offsets = [7, 0], sizes = [1, 16], strides = [1, 1]} : vector<8x16xf32> to vector<1x16xf32>
    %252 = tpu.concatenate %244, %245, %246, %247, %248, %249, %250, %251 in 1 : vector<1x16xf32>, vector<1x16xf32>, vector<1x16xf32>, vector<1x16xf32>, vector<1x16xf32>, vector<1x16xf32>, vector<1x16xf32>, vector<1x16xf32> -> vector<1x128xf32>
    %253 = vector.broadcast %194 : vector<8x1xf32> to vector<8x128xf32>
    %254 = vector.broadcast %252 : vector<1x128xf32> to vector<8x128xf32>
    %255 = arith.mulf %253, %254 : vector<8x128xf32>
    %256 = arith.addf %193, %255 : vector<8x128xf32>
    %257 = vector.broadcast %3 : vector<8x1xf32> to vector<8x128xf32>
    %258 = arith.addf %256, %257 : vector<8x128xf32>
    %c0_20 = arith.constant 0 : index
    %c0_21 = arith.constant 0 : index
    %c0_22 = arith.constant 0 : index
    %259 = vector.load %arg6[%c0_20, %c0_21, %c0_22] : memref<1x8x128xf32, #tpu.memory_space<vmem>>, vector<1x8x128xf32>
    %260 = vector.shape_cast %259 : vector<1x8x128xf32> to vector<8x128xf32>
    %261 = vector.shape_cast %258 : vector<8x128xf32> to vector<1x8x128xf32>
    tpu.vector_store %arg6[%c0_20, %c0_21, %c0_22], %261 {strides = array<i32>} : memref<1x8x128xf32, #tpu.memory_space<vmem>>, vector<1x8x128xf32>,
    return
  }
  func.func @transform_0(%arg0: i32, %arg1: i32) -> (i32, i32, i32, i32) {
    %c0_i32 = arith.constant 0 : i32
    %c0_i32_0 = arith.constant 0 : i32
    %c0_i32_1 = arith.constant 0 : i32
    %c0_i32_2 = arith.constant 0 : i32
    return %arg0, %c0_i32, %c0_i32_0, %c0_i32_1 : i32, i32, i32, i32
  }
  func.func @transform_1(%arg0: i32, %arg1: i32) -> i32 {
    %c0_i32 = arith.constant 0 : i32
    %c0_i32_0 = arith.constant 0 : i32
    return %c0_i32 : i32
  }
  func.func @transform_2(%arg0: i32, %arg1: i32) -> (i32, i32) {
    %c0_i32 = arith.constant 0 : i32
    %c0_i32_0 = arith.constant 0 : i32
    %c0_i32_1 = arith.constant 0 : i32
    return %c0_i32, %c0_i32_0 : i32, i32
  }
  func.func @transform_3(%arg0: i32, %arg1: i32) -> (i32, i32) {
    %c0_i32 = arith.constant 0 : i32
    %c0_i32_0 = arith.constant 0 : i32
    %c0_i32_1 = arith.constant 0 : i32
    return %c0_i32, %c0_i32_0 : i32, i32
  }
  func.func @transform_4(%arg0: i32, %arg1: i32) -> (i32, i32, i32) {
    %c0_i32 = arith.constant 0 : i32
    %c0_i32_0 = arith.constant 0 : i32
    return %arg0, %c0_i32, %arg1 : i32, i32, i32
  }
}

</mosaic_0001>

<llo_original>
// kernel: tpu_custom_call.1
$region0: #{tpu_custom_call.1}
  #allocation0 [shape = 'u32[]', space=smem, size = 0x4, offset = 0x4, fixed_abs, tag = 'smem constant byte address 0x4 - core index']
  #allocation1 [shape = 'u32[144,128]{1,0:T(1,128)}', space=vmem, size = 0x12000, scoped, tag = 'internal scratch']
  %s0 = inlined_call_operand.vmem [shape: f32[2,4,18,18], index: 0, kind: input, shape index: {}]
  %s1 = inlined_call_operand.vmem [shape: f32[36], index: 1, kind: input, shape index: {}]
  %s2 = inlined_call_operand.vmem [shape: f32[8,4], index: 2, kind: input, shape index: {}]
  %s3 = inlined_call_operand.vmem [shape: f32[8,1], index: 3, kind: input, shape index: {}]
  %s4 = inlined_call_operand.hbm [shape: f32[2,8,256], index: 4, kind: output, shape index: {}]
  %s5 = sld [smem:[#allocation0]]
  $region53: #{tpu_custom_call.1} parent=0
    _
  %s7 = ssub.s32 1, %s5
  %s8 = scalar_select 0, %s7, %s5
  $region1: #{tpu_custom_call.1} parent=0
    #allocation2 [shape = 'u8[512]{0}', space=smem, size = 0x200, scoped, tag = 'input window, operand 1, single buffered']
    #allocation3 [shape = 's32[2]{0}', space=sflag, size = 0x8, scoped, tag = 'scoped memory for tpu_custom_call.1']
    #allocation4 [shape = 's32[2]{0}', space=sflag, size = 0x8, scoped, tag = 'scoped memory for tpu_custom_call.1']
    #allocation5 [shape = 'u8[8192]{0}', space=vmem, size = 0x2000, scoped, tag = 'output window, operand 0']
    %9 = vsyncpa [#allocation4], 0
    %10 = vsyncpa [#allocation3], 0
    %s11 = scalar_lea.sflag [#allocation3], 1
    %12 = vsyncpa %s11, 0
    loop: start=0, step=1, limit=6
    $region2: #{tpu_custom_call.1} parent=1 // loop_pre_header
      _
    $region3: #{tpu_custom_call.1} parent=1 // loop_header
      %s14 = sphi 0, %s18
      %p15 = scmp.ge.s32.totalorder %s14, 6
      %s21 = sphi 0, %s33
      %s22 = sphi 0, %s29
      %s23 = sphi 0, %s21
      %s24 = sphi 0, %s22
      %s25 = sphi 0, %s23
      %s26 = sphi 0, %s24
      %s36 = sphi 0, %s38
      %s39 = sphi 0, %s36
      %s40 = sphi 0, %s39
      %s56 = sphi 0, %s40
      %s60 = sphi 0, %s60
      %s62 = sphi 0, %s60
      %s63 = sphi 0, %s62
      %s77 = sphi 0, %s63
      %s81 = sphi 0, %s81
      %s83 = sphi 0, %s81
      %s84 = sphi 0, %s83
      %s98 = sphi 0, %s84
      %s102 = sphi 0, %s102
      %s104 = sphi 0, %s102
      %s105 = sphi 0, %s104
      %s119 = sphi 0, %s105
      %s127 = sphi 0, %s129
      %s130 = sphi 0, %s127
      %s131 = sphi 0, %s130
      %s147 = sphi 0, %s131
    $region4: #{tpu_custom_call.1} parent=1 // loop_header_branch
      %17 = sbr.rel (%p15) target = $region8
    $region5: #{tpu_custom_call.1} parent=1 // loop_body
      %s19 = ssub.s32 %s14, 1
      %s20 = ssub.s32 %s14, 2
      %s27 = sadd.s32 1, %s22
      %p28 = scmp.ge.s32.totalorder %s27, 2
      %s29 = scalar_select %p28, 0, %s27
      %s30 = sadd.s32 1, %s21
      %s31 = scalar_select %p28, %s30, %s21
      %p32 = scmp.ge.s32.totalorder %s31, 2
      %s33 = scalar_select %p32, 0, %s31
      %s34 = ssub.s32 %s21, %s33
      %p35 = scmp.eq.s32.totalorder %s34, 0
      %s37 = sadd.s32 %s36, 1
      %s38 = scalar_select %p35, %s36, %s37
      %p41 = pneg %p35
      %p42 = scmp.eq.s32.totalorder %s14, 3
      %p43 = por %p41, %p42
      %p44 = scmp.ne.s32.totalorder %s36, %s39
      %p45 = scmp.eq.s32.totalorder %s14, 0
      %p46 = por %p44, %p45
      %p47 = scmp.ne.s32.totalorder %s36, %s39
      %p48 = scmp.eq.s32.totalorder %s19, 3
      %p49 = por %p47, %p48
      %p50 = scmp.ne.s32.totalorder %s39, %s40
      %p51 = scmp.eq.s32.totalorder %s19, 0
      %p52 = por %p50, %p51
      %p53 = scmp.ne.s32.totalorder %s39, %s40
      %p54 = scmp.eq.s32.totalorder %s20, 3
      %p55 = por %p53, %p54
      %p57 = scmp.ne.s32.totalorder %s40, %s56
      %p58 = scmp.eq.s32.totalorder %s20, 0
      %p59 = por %p57, %p58
      %s61 = sadd.s32 %s60, 1
      %p64 = scmp.eq.s32.totalorder %s14, 3
      %p65 = scmp.ne.s32.totalorder %s60, %s62
      %p66 = scmp.eq.s32.totalorder %s14, 0
      %p67 = por %p65, %p66
      %p68 = scmp.ne.s32.totalorder %s60, %s62
      %p69 = scmp.eq.s32.totalorder %s19, 3
      %p70 = por %p68, %p69
      %p71 = scmp.ne.s32.totalorder %s62, %s63
      %p72 = scmp.eq.s32.totalorder %s19, 0
      %p73 = por %p71, %p72
      %p74 = scmp.ne.s32.totalorder %s62, %s63
      %p75 = scmp.eq.s32.totalorder %s20, 3
      %p76 = por %p74, %p75
      %p78 = scmp.ne.s32.totalorder %s63, %s77
      %p79 = scmp.eq.s32.totalorder %s20, 0
      %p80 = por %p78, %p79
      %s82 = sadd.s32 %s81, 1
      %p85 = scmp.eq.s32.totalorder %s14, 3
      %p86 = scmp.ne.s32.totalorder %s81, %s83
      %p87 = scmp.eq.s32.totalorder %s14, 0
      %p88 = por %p86, %p87
      %p89 = scmp.ne.s32.totalorder %s81, %s83
      %p90 = scmp.eq.s32.totalorder %s19, 3
      %p91 = por %p89, %p90
      %p92 = scmp.ne.s32.totalorder %s83, %s84
      %p93 = scmp.eq.s32.totalorder %s19, 0
      %p94 = por %p92, %p93
      %p95 = scmp.ne.s32.totalorder %s83, %s84
      %p96 = scmp.eq.s32.totalorder %s20, 3
      %p97 = por %p95, %p96
      %p99 = scmp.ne.s32.totalorder %s84, %s98
      %p100 = scmp.eq.s32.totalorder %s20, 0
      %p101 = por %p99, %p100
      %s103 = sadd.s32 %s102, 1
      %p106 = scmp.eq.s32.totalorder %s14, 3
      %p107 = scmp.ne.s32.totalorder %s102, %s104
      %p108 = scmp.eq.s32.totalorder %s14, 0
      %p109 = por %p107, %p108
      %p110 = scmp.ne.s32.totalorder %s102, %s104
      %p111 = scmp.eq.s32.totalorder %s19, 3
      %p112 = por %p110, %p111
      %p113 = scmp.ne.s32.totalorder %s104, %s105
      %p114 = scmp.eq.s32.totalorder %s19, 0
      %p115 = por %p113, %p114
      %p116 = scmp.ne.s32.totalorder %s104, %s105
      %p117 = scmp.eq.s32.totalorder %s20, 3
      %p118 = por %p116, %p117
      %p120 = scmp.ne.s32.totalorder %s105, %s119
      %p121 = scmp.eq.s32.totalorder %s20, 0
      %p122 = por %p120, %p121
      %s123 = ssub.s32 %s21, %s33
      %s124 = ssub.s32 %s22, %s29
      %s125 = sor.u32 %s123, %s124
      %p126 = scmp.eq.s32.totalorder %s125, 0
      %s128 = sadd.s32 %s127, 1
      %s129 = scalar_select %p126, %s127, %s128
      %p132 = pneg %p126
      %p133 = scmp.eq.s32.totalorder %s14, 3
      %p134 = por %p132, %p133
      %p135 = scmp.ne.s32.totalorder %s127, %s130
      %p136 = scmp.eq.s32.totalorder %s14, 0
      %p137 = por %p135, %p136
      %p138 = scmp.ne.s32.totalorder %s127, %s130
      %p139 = scmp.eq.s32.totalorder %s19, 3
      %p140 = por %p138, %p139
      %p141 = scmp.ne.s32.totalorder %s130, %s131
      %p142 = scmp.eq.s32.totalorder %s19, 0
      %p143 = por %p141, %p142
      %p144 = scmp.ne.s32.totalorder %s130, %s131
      %p145 = scmp.eq.s32.totalorder %s20, 3
      %p146 = por %p144, %p145
      %p148 = scmp.ne.s32.totalorder %s131, %s147
      %p149 = scmp.eq.s32.totalorder %s20, 0
      %p150 = por %p148, %p149
      %p151 = scmp.le.s32.totalorder 1, %s14
      %p152 = scmp.lt.s32.totalorder %s14, 5
      %p153 = pnand %p151, %p152
      %p154 = pneg %p153
      // Predicated region
      $region9: #{tpu_custom_call.1} parent=5 // pred_check
        _
      $region10: #{tpu_custom_call.1} parent=5 // pred_check_branch
        %156 = sbr.rel (%p153) target = $region12
      $region11: #{tpu_custom_call.1} parent=5 // pred_region
        %s157 = ssub.s32 %s14, 1
        // Predicated region
        $region13: #{tpu_custom_call.1} parent=11 // pred_check
          %p158 = pneg %p73
        $region14: #{tpu_custom_call.1} parent=11 // pred_check_branch
          %160 = sbr.rel (%p158) target = $region16
        $region15: #{tpu_custom_call.1} parent=11 // pred_region
          %s162 = ssub.s32 16, 16
          %163 = vsyncadd [#allocation4], %s162
          %s165 = sshll.u32 %s1, 4
          %s166 = int_to_ptr.vmem [resolvable:$true] %s165
          %168 = dma.vmem_to_smem %s166, 16, [#allocation2], [#allocation4]
        $region16: #{tpu_custom_call.1} parent=11 // pred_fallthru
          _
        // Predicated region
        $region17: #{tpu_custom_call.1} parent=11 // pred_check
          %p169 = pneg %p94
        $region18: #{tpu_custom_call.1} parent=11 // pred_check_branch
          %171 = sbr.rel (%p169) target = $region20
        $region19: #{tpu_custom_call.1} parent=11 // pred_region
          _
        $region20: #{tpu_custom_call.1} parent=11 // pred_fallthru
          _
        // Predicated region
        $region21: #{tpu_custom_call.1} parent=11 // pred_check
          %p172 = pneg %p115
        $region22: #{tpu_custom_call.1} parent=11 // pred_check_branch
          %174 = sbr.rel (%p172) target = $region24
        $region23: #{tpu_custom_call.1} parent=11 // pred_region
          _
        $region24: #{tpu_custom_call.1} parent=11 // pred_fallthru
          _
      $region12: #{tpu_custom_call.1} parent=5 // pred_fallthru
        _
      %p175 = scmp.lt.s32.totalorder %s14, 4
      // Predicated region
      $region25: #{tpu_custom_call.1} parent=5 // pred_check
        %p176 = pneg %p175
      $region26: #{tpu_custom_call.1} parent=5 // pred_check_branch
        %178 = sbr.rel (%p176) target = $region28
      $region27: #{tpu_custom_call.1} parent=5 // pred_region
        // Predicated region
        $region29: #{tpu_custom_call.1} parent=27 // pred_check
          %p179 = pneg %p46
        $region30: #{tpu_custom_call.1} parent=27 // pred_check_branch
          %181 = sbr.rel (%p179) target = $region32
        $region31: #{tpu_custom_call.1} parent=27 // pred_region
          %p182 = scmp.lt.s32.totalorder %s21, 1
          %s183 = scalar_select %p182, %s21, 1
          %s184 = smul.addr %s183, 12
          %s185 = smul.addr %s184, 8
          %s186 = scalar_lea.vmem %s0, %s185
        $region32: #{tpu_custom_call.1} parent=27 // pred_fallthru
          _
      $region28: #{tpu_custom_call.1} parent=5 // pred_fallthru
        _
      %p187 = scmp.le.s32.totalorder 1, %s14
      %p188 = scmp.lt.s32.totalorder %s14, 5
      %p189 = pnand %p187, %p188
      %p190 = pneg %p189
      // Predicated region
      $region33: #{tpu_custom_call.1} parent=5 // pred_check
        _
      $region34: #{tpu_custom_call.1} parent=5 // pred_check_branch
        %192 = sbr.rel (%p189) target = $region36
      $region35: #{tpu_custom_call.1} parent=5 // pred_region
        %s193 = ssub.s32 %s14, 1
        // Predicated region
        $region37: #{tpu_custom_call.1} parent=35 // pred_check
          %p194 = pneg %p73
        $region38: #{tpu_custom_call.1} parent=35 // pred_check_branch
          %196 = sbr.rel (%p194) target = $region40
        $region39: #{tpu_custom_call.1} parent=35 // pred_region
          %197 = dma.done [#allocation4], 16
        $region40: #{tpu_custom_call.1} parent=35 // pred_fallthru
          _
        %198 = sfence
        %p199 = scmp.lt.s32.totalorder %s23, 1
        %s200 = scalar_select %p199, %s23, 1
        %s201 = smul.addr %s200, 12
        %s202 = smul.addr %s201, 8
        %s203 = scalar_lea.vmem %s0, %s202
        %p204 = pneg %p52
        %p205 = pneg %p49
        %p206 = pneg %p73
        %p207 = pneg %p70
        %p208 = pneg %p94
        %p209 = pneg %p91
        %p210 = pneg %p115
        %p211 = pneg %p112
        %p212 = pneg %p143
        %p213 = pneg %p140
        %s214 = sand.u32 %s130, 1
        %s215 = scalar_lea.sflag [#allocation3], %s214
        %s216 = sand.u32 %s130, 1
        %s217 = smul.addr %s216, 8
        %s218 = scalar_lea.vmem [#allocation5], %s217
        %p219 = scmp.lt.s32.totalorder %s23, 1
        %s220 = scalar_select %p219, %s23, 1
        %s221 = smul.addr %s220, 12
        %s222 = smul.addr %s221, 8
        %s223 = scalar_lea.vmem %s0, %s222
        %s224 = smul.u32 %s24, 8
        %v225 = vld [vmem:[%s2] sm:$0xff]
        %v226 = vld [vmem:[%s3] sm:$0xff]
        %s227 = scalar_lea.vmem %s223, %s224
        %v228 = vld [vmem:[%s227] sm:$0xff]
        %v229 = vld [vmem:[%s227 + $0x8] sm:$0x3]
        %s230 = sld [smem:[#allocation2]]
        %v231 = vstv %s230
        %v232 = vmul.f32 %v228, %v231
        %v233 = vadd.f32 %v232, 0.0
        %s234 = sld [smem:[#allocation2 + $0x1]]
        %v235 = vstv %s234
        %v236 = vmul.f32 %v228, %v235
        %238 = vrot.lane.b32.xlu0 %v236, 127
        %v239 = vpop.permute.xlu0 %238
        %v241 = vadd.f32 %v233, %v239
        %s242 = sld [smem:[#allocation2 + $0x2]]
        %v243 = vstv %s242
        %v244 = vmul.f32 %v228, %v243
        %246 = vrot.lane.b32.xlu0 %v244, 126
        %v247 = vpop.permute.xlu0 %246
        %v249 = vadd.f32 %v241, %v247
        %s250 = sld [smem:[#allocation2 + $0x3]]
        %v251 = vstv %s250
        %v252 = vmul.f32 %v228, %v251
        %v253 = vmul.f32 %v229, %v251
        %vm256 = vcmask 1046528
        %v257 = vrot.slane %v252, 1
        %v258 = vrot.slane %v253, 1
        %v259 = vsel %vm256, %v257, %v258
        %v261 = vadd.f32 %v249, %v259
        %s262 = sld [smem:[#allocation2 + $0x4]]
        %v263 = vstv %s262
        %v264 = vmul.f32 %v228, %v263
        %v265 = vmul.f32 %v229, %v263
        %v268 = vrot.slane %v264, 1
        %v269 = vrot.slane %v265, 1
        %v270 = vsel %vm256, %v268, %v269
        %271 = vrot.lane.b32.xlu0 %v270, 127
        %v272 = vpop.permute.xlu0 %271
        %v274 = vadd.f32 %v261, %v272
        %s275 = sld [smem:[#allocation2 + $0x5]]
        %v276 = vstv %s275
        %v277 = vmul.f32 %v228, %v276
        %v278 = vmul.f32 %v229, %v276
        %v281 = vrot.slane %v277, 1
        %v282 = vrot.slane %v278, 1
        %v283 = vsel %vm256, %v281, %v282
        %284 = vrot.lane.b32.xlu0 %v283, 126
        %v285 = vpop.permute.xlu0 %284
        %v287 = vadd.f32 %v274, %v285
        %s288 = sld [smem:[#allocation2 + $0x6]]
        %v289 = vstv %s288
        %v290 = vmul.f32 %v228, %v289
        %v291 = vmul.f32 %v229, %v289
        %vm294 = vcmask 1045504
        %v295 = vrot.slane %v290, 2
        %v296 = vrot.slane %v291, 2
        %v297 = vsel %vm294, %v295, %v296
        %v299 = vadd.f32 %v287, %v297
        %s300 = sld [smem:[#allocation2 + $0x7]]
        %v301 = vstv %s300
        %v302 = vmul.f32 %v228, %v301
        %v303 = vmul.f32 %v229, %v301
        %v306 = vrot.slane %v302, 2
        %v307 = vrot.slane %v303, 2
        %v308 = vsel %vm294, %v306, %v307
        %309 = vrot.lane.b32.xlu0 %v308, 127
        %v310 = vpop.permute.xlu0 %309
        %v312 = vadd.f32 %v299, %v310
        %s313 = sld [smem:[#allocation2 + $0x8]]
        %v314 = vstv %s313
        %v315 = vmul.f32 %v228, %v314
        %v316 = vmul.f32 %v229, %v314
        %v319 = vrot.slane %v315, 2
        %v320 = vrot.slane %v316, 2
        %v321 = vsel %vm294, %v319, %v320
        %322 = vrot.lane.b32.xlu0 %v321, 126
        %v323 = vpop.permute.xlu0 %322
        %v325 = vadd.f32 %v312, %v323
        %v327 = vrot.slane %v325, 1
        %328 = vrot.lane.b32.xlu0 %v327, 16
        %v329 = vpop.permute.xlu0 %328
        %v331 = vrot.slane %v325, 2
        %332 = vrot.lane.b32.xlu0 %v331, 32
        %v333 = vpop.permute.xlu0 %332
        %v335 = vrot.slane %v325, 3
        %336 = vrot.lane.b32.xlu0 %v335, 48
        %v337 = vpop.permute.xlu0 %336
        %v339 = vrot.slane %v325, 4
        %340 = vrot.lane.b32.xlu0 %v339, 64
        %v341 = vpop.permute.xlu0 %340
        %v343 = vrot.slane %v325, 5
        %344 = vrot.lane.b32.xlu0 %v343, 80
        %v345 = vpop.permute.xlu0 %344
        %v347 = vrot.slane %v325, 6
        %348 = vrot.lane.b32.xlu0 %v347, 96
        %v349 = vpop.permute.xlu0 %348
        %v351 = vrot.slane %v325, 7
        %352 = vrot.lane.b32.xlu0 %v351, 112
        %v353 = vpop.permute.xlu0 %352
        %vm355 = vcmask 130048
        %v356 = vsel %vm355, %v325, %v329
        %vm357 = vcmask 261120
        %v358 = vsel %vm357, %v356, %v333
        %vm359 = vcmask 392192
        %v360 = vsel %vm359, %v358, %v337
        %vm361 = vcmask 523264
        %v362 = vsel %vm361, %v360, %v341
        %vm363 = vcmask 654336
        %v364 = vsel %vm363, %v362, %v345
        %vm365 = vcmask 785408
        %v366 = vsel %vm365, %v364, %v349
        %vm367 = vcmask 916480
        %v368 = vsel %vm367, %v366, %v353
        %370 = vset.pattern.permute.xlu0 0
        %371 = vperm.xlu0 %370, %v225
        %v372 = vpop.permute.xlu0 %371
        %v374 = vlaneseq
        %v375 = vshrl.u32 %v374, 7
        %v376 = vsub.s32 0, %v375
        %v377 = vrot.slane %v368, %v376
        %v378 = vmul.f32 %v372, %v377
        %v379 = vadd.f32 %v378, 0.0
        %s380 = sadd.s32 %s224, 24
        %s381 = scalar_lea.vmem %s223, %s380
        %v382 = vld [vmem:[%s381] sm:$0xff]
        %v383 = vld [vmem:[%s381 + $0x8] sm:$0x3]
        %s384 = sld [smem:[#allocation2 + $0x9]]
        %v385 = vstv %s384
        %v386 = vmul.f32 %v382, %v385
        %v387 = vadd.f32 %v386, 0.0
        %s388 = sld [smem:[#allocation2 + $0xa]]
        %v389 = vstv %s388
        %v390 = vmul.f32 %v382, %v389
        %392 = vrot.lane.b32.xlu0 %v390, 127
        %v393 = vpop.permute.xlu0 %392
        %v395 = vadd.f32 %v387, %v393
        %s396 = sld [smem:[#allocation2 + $0xb]]
        %v397 = vstv %s396
        %v398 = vmul.f32 %v382, %v397
        %400 = vrot.lane.b32.xlu0 %v398, 126
        %v401 = vpop.permute.xlu0 %400
        %v403 = vadd.f32 %v395, %v401
        %s404 = sld [smem:[#allocation2 + $0xc]]
        %v405 = vstv %s404
        %v406 = vmul.f32 %v382, %v405
        %v407 = vmul.f32 %v383, %v405
        %v410 = vrot.slane %v406, 1
        %v411 = vrot.slane %v407, 1
        %v412 = vsel %vm256, %v410, %v411
        %v414 = vadd.f32 %v403, %v412
        %s415 = sld [smem:[#allocation2 + $0xd]]
        %v416 = vstv %s415
        %v417 = vmul.f32 %v382, %v416
        %v418 = vmul.f32 %v383, %v416
        %v421 = vrot.slane %v417, 1
        %v422 = vrot.slane %v418, 1
        %v423 = vsel %vm256, %v421, %v422
        %424 = vrot.lane.b32.xlu0 %v423, 127
        %v425 = vpop.permute.xlu0 %424
        %v427 = vadd.f32 %v414, %v425
        %s428 = sld [smem:[#allocation2 + $0xe]]
        %v429 = vstv %s428
        %v430 = vmul.f32 %v382, %v429
        %v431 = vmul.f32 %v383, %v429
        %v434 = vrot.slane %v430, 1
        %v435 = vrot.slane %v431, 1
        %v436 = vsel %vm256, %v434, %v435
        %437 = vrot.lane.b32.xlu0 %v436, 126
        %v438 = vpop.permute.xlu0 %437
        %v440 = vadd.f32 %v427, %v438
        %s441 = sld [smem:[#allocation2 + $0xf]]
        %v442 = vstv %s441
        %v443 = vmul.f32 %v382, %v442
        %v444 = vmul.f32 %v383, %v442
        %v447 = vrot.slane %v443, 2
        %v448 = vrot.slane %v444, 2
        %v449 = vsel %vm294, %v447, %v448
        %v451 = vadd.f32 %v440, %v449
        %s452 = sld [smem:[#allocation2 + $0x10]]
        %v453 = vstv %s452
        %v454 = vmul.f32 %v382, %v453
        %v455 = vmul.f32 %v383, %v453
        %v458 = vrot.slane %v454, 2
        %v459 = vrot.slane %v455, 2
        %v460 = vsel %vm294, %v458, %v459
        %461 = vrot.lane.b32.xlu0 %v460, 127
        %v462 = vpop.permute.xlu0 %461
        %v464 = vadd.f32 %v451, %v462
        %s465 = sld [smem:[#allocation2 + $0x11]]
        %v466 = vstv %s465
        %v467 = vmul.f32 %v382, %v466
        %v468 = vmul.f32 %v383, %v466
        %v471 = vrot.slane %v467, 2
        %v472 = vrot.slane %v468, 2
        %v473 = vsel %vm294, %v471, %v472
        %474 = vrot.lane.b32.xlu0 %v473, 126
        %v475 = vpop.permute.xlu0 %474
        %v477 = vadd.f32 %v464, %v475
        %v479 = vrot.slane %v477, 1
        %480 = vrot.lane.b32.xlu0 %v479, 16
        %v481 = vpop.permute.xlu0 %480
        %v483 = vrot.slane %v477, 2
        %484 = vrot.lane.b32.xlu0 %v483, 32
        %v485 = vpop.permute.xlu0 %484
        %v487 = vrot.slane %v477, 3
        %488 = vrot.lane.b32.xlu0 %v487, 48
        %v489 = vpop.permute.xlu0 %488
        %v491 = vrot.slane %v477, 4
        %492 = vrot.lane.b32.xlu0 %v491, 64
        %v493 = vpop.permute.xlu0 %492
        %v495 = vrot.slane %v477, 5
        %496 = vrot.lane.b32.xlu0 %v495, 80
        %v497 = vpop.permute.xlu0 %496
        %v499 = vrot.slane %v477, 6
        %500 = vrot.lane.b32.xlu0 %v499, 96
        %v501 = vpop.permute.xlu0 %500
        %v503 = vrot.slane %v477, 7
        %504 = vrot.lane.b32.xlu0 %v503, 112
        %v505 = vpop.permute.xlu0 %504
        %v507 = vsel %vm355, %v477, %v481
        %v508 = vsel %vm357, %v507, %v485
        %v509 = vsel %vm359, %v508, %v489
        %v510 = vsel %vm361, %v509, %v493
        %v511 = vsel %vm363, %v510, %v497
        %v512 = vsel %vm365, %v511, %v501
        %v513 = vsel %vm367, %v512, %v505
        %514 = vset.pattern.permute.xlu0 1
        %515 = vperm.xlu0 %514, %v225
        %v516 = vpop.permute.xlu0 %515
        %v518 = vlaneseq
        %v519 = vshrl.u32 %v518, 7
        %v520 = vsub.s32 0, %v519
        %v521 = vrot.slane %v513, %v520
        %v522 = vmul.f32 %v516, %v521
        %v523 = vadd.f32 %v379, %v522
        %s524 = sadd.s32 %s224, 48
        %s525 = scalar_lea.vmem %s223, %s524
        %v526 = vld [vmem:[%s525] sm:$0xff]
        %v527 = vld [vmem:[%s525 + $0x8] sm:$0x3]
        %s528 = sld [smem:[#allocation2 + $0x12]]
        %v529 = vstv %s528
        %v530 = vmul.f32 %v526, %v529
        %v531 = vadd.f32 %v530, 0.0
        %s532 = sld [smem:[#allocation2 + $0x13]]
        %v533 = vstv %s532
        %v534 = vmul.f32 %v526, %v533
        %536 = vrot.lane.b32.xlu0 %v534, 127
        %v537 = vpop.permute.xlu0 %536
        %v539 = vadd.f32 %v531, %v537
        %s540 = sld [smem:[#allocation2 + $0x14]]
        %v541 = vstv %s540
        %v542 = vmul.f32 %v526, %v541
        %544 = vrot.lane.b32.xlu0 %v542, 126
        %v545 = vpop.permute.xlu0 %544
        %v547 = vadd.f32 %v539, %v545
        %s548 = sld [smem:[#allocation2 + $0x15]]
        %v549 = vstv %s548
        %v550 = vmul.f32 %v526, %v549
        %v551 = vmul.f32 %v527, %v549
        %v554 = vrot.slane %v550, 1
        %v555 = vrot.slane %v551, 1
        %v556 = vsel %vm256, %v554, %v555
        %v558 = vadd.f32 %v547, %v556
        %s559 = sld [smem:[#allocation2 + $0x16]]
        %v560 = vstv %s559
        %v561 = vmul.f32 %v526, %v560
        %v562 = vmul.f32 %v527, %v560
        %v565 = vrot.slane %v561, 1
        %v566 = vrot.slane %v562, 1
        %v567 = vsel %vm256, %v565, %v566
        %568 = vrot.lane.b32.xlu0 %v567, 127
        %v569 = vpop.permute.xlu0 %568
        %v571 = vadd.f32 %v558, %v569
        %s572 = sld [smem:[#allocation2 + $0x17]]
        %v573 = vstv %s572
        %v574 = vmul.f32 %v526, %v573
        %v575 = vmul.f32 %v527, %v573
        %v578 = vrot.slane %v574, 1
        %v579 = vrot.slane %v575, 1
        %v580 = vsel %vm256, %v578, %v579
        %581 = vrot.lane.b32.xlu0 %v580, 126
        %v582 = vpop.permute.xlu0 %581
        %v584 = vadd.f32 %v571, %v582
        %s585 = sld [smem:[#allocation2 + $0x18]]
        %v586 = vstv %s585
        %v587 = vmul.f32 %v526, %v586
        %v588 = vmul.f32 %v527, %v586
        %v591 = vrot.slane %v587, 2
        %v592 = vrot.slane %v588, 2
        %v593 = vsel %vm294, %v591, %v592
        %v595 = vadd.f32 %v584, %v593
        %s596 = sld [smem:[#allocation2 + $0x19]]
        %v597 = vstv %s596
        %v598 = vmul.f32 %v526, %v597
        %v599 = vmul.f32 %v527, %v597
        %v602 = vrot.slane %v598, 2
        %v603 = vrot.slane %v599, 2
        %v604 = vsel %vm294, %v602, %v603
        %605 = vrot.lane.b32.xlu0 %v604, 127
        %v606 = vpop.permute.xlu0 %605
        %v608 = vadd.f32 %v595, %v606
        %s609 = sld [smem:[#allocation2 + $0x1a]]
        %v610 = vstv %s609
        %v611 = vmul.f32 %v526, %v610
        %v612 = vmul.f32 %v527, %v610
        %v615 = vrot.slane %v611, 2
        %v616 = vrot.slane %v612, 2
        %v617 = vsel %vm294, %v615, %v616
        %618 = vrot.lane.b32.xlu0 %v617, 126
        %v619 = vpop.permute.xlu0 %618
        %v621 = vadd.f32 %v608, %v619
        %v623 = vrot.slane %v621, 1
        %624 = vrot.lane.b32.xlu0 %v623, 16
        %v625 = vpop.permute.xlu0 %624
        %v627 = vrot.slane %v621, 2
        %628 = vrot.lane.b32.xlu0 %v627, 32
        %v629 = vpop.permute.xlu0 %628
        %v631 = vrot.slane %v621, 3
        %632 = vrot.lane.b32.xlu0 %v631, 48
        %v633 = vpop.permute.xlu0 %632
        %v635 = vrot.slane %v621, 4
        %636 = vrot.lane.b32.xlu0 %v635, 64
        %v637 = vpop.permute.xlu0 %636
        %v639 = vrot.slane %v621, 5
        %640 = vrot.lane.b32.xlu0 %v639, 80
        %v641 = vpop.permute.xlu0 %640
        %v643 = vrot.slane %v621, 6
        %644 = vrot.lane.b32.xlu0 %v643, 96
        %v645 = vpop.permute.xlu0 %644
        %v647 = vrot.slane %v621, 7
        %648 = vrot.lane.b32.xlu0 %v647, 112
        %v649 = vpop.permute.xlu0 %648
        %v651 = vsel %vm355, %v621, %v625
        %v652 = vsel %vm357, %v651, %v629
        %v653 = vsel %vm359, %v652, %v633
        %v654 = vsel %vm361, %v653, %v637
        %v655 = vsel %vm363, %v654, %v641
        %v656 = vsel %vm365, %v655, %v645
        %v657 = vsel %vm367, %v656, %v649
        %658 = vset.pattern.permute.xlu0 2
        %659 = vperm.xlu0 %658, %v225
        %v660 = vpop.permute.xlu0 %659
        %v662 = vlaneseq
        %v663 = vshrl.u32 %v662, 7
        %v664 = vsub.s32 0, %v663
        %v665 = vrot.slane %v657, %v664
        %v666 = vmul.f32 %v660, %v665
        %v667 = vadd.f32 %v523, %v666
        %s668 = sadd.s32 %s224, 72
        %s669 = scalar_lea.vmem %s223, %s668
        %v670 = vld [vmem:[%s669] sm:$0xff]
        %v671 = vld [vmem:[%s669 + $0x8] sm:$0x3]
        %s672 = sld [smem:[#allocation2 + $0x1b]]
        %v673 = vstv %s672
        %v674 = vmul.f32 %v670, %v673
        %v675 = vadd.f32 %v674, 0.0
        %s676 = sld [smem:[#allocation2 + $0x1c]]
        %v677 = vstv %s676
        %v678 = vmul.f32 %v670, %v677
        %680 = vrot.lane.b32.xlu0 %v678, 127
        %v681 = vpop.permute.xlu0 %680
        %v683 = vadd.f32 %v675, %v681
        %s684 = sld [smem:[#allocation2 + $0x1d]]
        %v685 = vstv %s684
        %v686 = vmul.f32 %v670, %v685
        %688 = vrot.lane.b32.xlu0 %v686, 126
        %v689 = vpop.permute.xlu0 %688
        %v691 = vadd.f32 %v683, %v689
        %s692 = sld [smem:[#allocation2 + $0x1e]]
        %v693 = vstv %s692
        %v694 = vmul.f32 %v670, %v693
        %v695 = vmul.f32 %v671, %v693
        %v698 = vrot.slane %v694, 1
        %v699 = vrot.slane %v695, 1
        %v700 = vsel %vm256, %v698, %v699
        %v702 = vadd.f32 %v691, %v700
        %s703 = sld [smem:[#allocation2 + $0x1f]]
        %v704 = vstv %s703
        %v705 = vmul.f32 %v670, %v704
        %v706 = vmul.f32 %v671, %v704
        %v709 = vrot.slane %v705, 1
        %v710 = vrot.slane %v706, 1
        %v711 = vsel %vm256, %v709, %v710
        %712 = vrot.lane.b32.xlu0 %v711, 127
        %v713 = vpop.permute.xlu0 %712
        %v715 = vadd.f32 %v702, %v713
        %s716 = sld [smem:[#allocation2 + $0x20]]
        %v717 = vstv %s716
        %v718 = vmul.f32 %v670, %v717
        %v719 = vmul.f32 %v671, %v717
        %v722 = vrot.slane %v718, 1
        %v723 = vrot.slane %v719, 1
        %v724 = vsel %vm256, %v722, %v723
        %725 = vrot.lane.b32.xlu0 %v724, 126
        %v726 = vpop.permute.xlu0 %725
        %v728 = vadd.f32 %v715, %v726
        %s729 = sld [smem:[#allocation2 + $0x21]]
        %v730 = vstv %s729
        %v731 = vmul.f32 %v670, %v730
        %v732 = vmul.f32 %v671, %v730
        %v735 = vrot.slane %v731, 2
        %v736 = vrot.slane %v732, 2
        %v737 = vsel %vm294, %v735, %v736
        %v739 = vadd.f32 %v728, %v737
        %s740 = sld [smem:[#allocation2 + $0x22]]
        %v741 = vstv %s740
        %v742 = vmul.f32 %v670, %v741
        %v743 = vmul.f32 %v671, %v741
        %v746 = vrot.slane %v742, 2
        %v747 = vrot.slane %v743, 2
        %v748 = vsel %vm294, %v746, %v747
        %749 = vrot.lane.b32.xlu0 %v748, 127
        %v750 = vpop.permute.xlu0 %749
        %v752 = vadd.f32 %v739, %v750
        %s753 = sld [smem:[#allocation2 + $0x23]]
        %v754 = vstv %s753
        %v755 = vmul.f32 %v670, %v754
        %v756 = vmul.f32 %v671, %v754
        %v759 = vrot.slane %v755, 2
        %v760 = vrot.slane %v756, 2
        %v761 = vsel %vm294, %v759, %v760
        %762 = vrot.lane.b32.xlu0 %v761, 126
        %v763 = vpop.permute.xlu0 %762
        %v765 = vadd.f32 %v752, %v763
        %v767 = vrot.slane %v765, 1
        %768 = vrot.lane.b32.xlu0 %v767, 16
        %v769 = vpop.permute.xlu0 %768
        %v771 = vrot.slane %v765, 2
        %772 = vrot.lane.b32.xlu0 %v771, 32
        %v773 = vpop.permute.xlu0 %772
        %v775 = vrot.slane %v765, 3
        %776 = vrot.lane.b32.xlu0 %v775, 48
        %v777 = vpop.permute.xlu0 %776
        %v779 = vrot.slane %v765, 4
        %780 = vrot.lane.b32.xlu0 %v779, 64
        %v781 = vpop.permute.xlu0 %780
        %v783 = vrot.slane %v765, 5
        %784 = vrot.lane.b32.xlu0 %v783, 80
        %v785 = vpop.permute.xlu0 %784
        %v787 = vrot.slane %v765, 6
        %788 = vrot.lane.b32.xlu0 %v787, 96
        %v789 = vpop.permute.xlu0 %788
        %v791 = vrot.slane %v765, 7
        %792 = vrot.lane.b32.xlu0 %v791, 112
        %v793 = vpop.permute.xlu0 %792
        %v795 = vsel %vm355, %v765, %v769
        %v796 = vsel %vm357, %v795, %v773
        %v797 = vsel %vm359, %v796, %v777
        %v798 = vsel %vm361, %v797, %v781
        %v799 = vsel %vm363, %v798, %v785
        %v800 = vsel %vm365, %v799, %v789
        %v801 = vsel %vm367, %v800, %v793
        %802 = vset.pattern.permute.xlu0 3
        %803 = vperm.xlu0 %802, %v225
        %v804 = vpop.permute.xlu0 %803
        %v806 = vlaneseq
        %v807 = vshrl.u32 %v806, 7
        %v808 = vsub.s32 0, %v807
        %v809 = vrot.slane %v801, %v808
        %v810 = vmul.f32 %v804, %v809
        %v811 = vadd.f32 %v667, %v810
        %813 = vset.pattern.permute.xlu0 0
        %814 = vperm.xlu0 %813, %v226
        %v815 = vpop.permute.xlu0 %814
        %v817 = vadd.f32 %v811, %v815
        %818 = vst [vmem:[%s218] sm:$0xff] %v817
        %s819 = sand.u32 %s130, 1
        %s820 = scalar_lea.sflag [#allocation3], %s819
        %s821 = sand.u32 %s130, 1
        %s822 = smul.addr %s821, 8
        %s823 = scalar_lea.vmem [#allocation5], %s822
        // Predicated region
        $region41: #{tpu_custom_call.1} parent=35 // pred_check
          %p824 = pneg %p140
        $region42: #{tpu_custom_call.1} parent=35 // pred_check_branch
          %826 = sbr.rel (%p824) target = $region44
        $region43: #{tpu_custom_call.1} parent=35 // pred_region
          %s828 = ssub.s32 128, 128
          %829 = vsyncadd %s820, %s828
          %s830 = smul.addr %s23, 2
          %s831 = sadd.s32 %s24, %s830
          %s832 = smul.addr %s831, 128
          %s833 = scalar_lea.hbm %s4, %s832
          %s835 = sshll.u32 %s823, 4
          %s836 = int_to_ptr.vmem [resolvable:$true] %s835
          %838 = dma.vmem_to_hbm [thread:$0]  %s836, 128, %s833, %s820
        $region44: #{tpu_custom_call.1} parent=35 // pred_fallthru
          _
      $region36: #{tpu_custom_call.1} parent=5 // pred_fallthru
        _
      %p839 = scmp.le.s32.totalorder 2, %s14
      // Predicated region
      $region45: #{tpu_custom_call.1} parent=5 // pred_check
        %p840 = pneg %p839
      $region46: #{tpu_custom_call.1} parent=5 // pred_check_branch
        %842 = sbr.rel (%p840) target = $region48
      $region47: #{tpu_custom_call.1} parent=5 // pred_region
        %s843 = ssub.s32 %s14, 2
        // Predicated region
        $region49: #{tpu_custom_call.1} parent=47 // pred_check
          %p844 = pneg %p146
        $region50: #{tpu_custom_call.1} parent=47 // pred_check_branch
          %846 = sbr.rel (%p844) target = $region52
        $region51: #{tpu_custom_call.1} parent=47 // pred_region
          %s847 = sand.u32 %s131, 1
          %s848 = scalar_lea.sflag [#allocation3], %s847
          %s849 = sand.u32 %s131, 1
          %s850 = smul.addr %s849, 8
          %s851 = scalar_lea.vmem [#allocation5], %s850
          %852 = dma.done %s848, 128
        $region52: #{tpu_custom_call.1} parent=47 // pred_fallthru
          _
      $region48: #{tpu_custom_call.1} parent=5 // pred_fallthru
        _
    $region6: #{tpu_custom_call.1} parent=1 // loop_footer
      %s18 = sadd.s32 1, %s14
    $region7: #{tpu_custom_call.1} parent=1 // loop_footer_branch
      %13 = sbr.rel target = $region3
    $region8: #{tpu_custom_call.1} parent=1 // loop_exit
      _
    %853 = vsyncpa [#allocation3], 1
    %s854 = scalar_lea.sflag [#allocation3], 1
    %855 = vsyncpa %s854, 1
    %856 = vsyncpa [#allocation4], 1
    %s857 = scalar_lea.sflag [#allocation4], 1
    %858 = vsyncpa %s857, 1

</llo_original>
